<compile_context>
chip_gen: v5e
topology: v5e:2x2
jax: 0.10.0
libtpu: 0.0.40
codegen_flags: <defaults>
</compile_context>

<pallas_src>
import random

import numpy as np

import jax
import jax.numpy as jnp
from jax.experimental import pallas as pl
from jax.experimental.pallas import tpu as pltpu

_MiB = 1024 * 1024


def _vmem_limit_bytes():
    """Scoped-VMEM request sized per TPU generation."""
    try:
        cap = int(pltpu.get_tpu_info().vmem_capacity_bytes)
    except Exception:
        cap = 0
    # v5e/v6e (128 MiB physical): raise the 16/32 MiB scoped default to 64 MiB.
    # v7x (64 MiB physical) or unknown hardware: stay at a safe 32 MiB.
    return 64 * _MiB if cap >= 128 * _MiB else 32 * _MiB


def _fold_factor(nc, s):
    """Planes folded per block row so the lane (last) dim is >= 128."""
    if s >= 128:
        return 1
    target = -(-128 // s)                 # cdiv(128, s)
    for k in range(target, nc + 1):       # smallest divisor of nc >= target
        if nc % k == 0:
            return k
    return nc


def _plan_tb(n_rows, row_len, in_itemsize, acc_itemsize, sublane, vmem_limit):
    """Rows per grid step, budgeted in accumulation-expanded bytes."""
    # Per-row VMEM cost of one block: double-buffered input + double-buffered
    # output (input dtype) plus ~4 live accumulation-dtype temporaries
    # (x/left/right then t/up/down).
    per_row = row_len * (4 * in_itemsize + 4 * acc_itemsize)
    budget = (vmem_limit * 3) // 4         # headroom for masks / pipeline state
    tb_vmem = max(1, budget // per_row)

    # 1-2 MiB (accumulation bytes) blocks already sit near the HBM roofline;
    # keeping them small buys more grid steps -> pipeline overlap + megacore
    # balance on v7x.
    tb_block = max(1, (2 * _MiB) // (row_len * acc_itemsize))

    tb = min(n_rows, tb_vmem, tb_block)

    # v7x megacore: split the "parallel" grid axis into >=2 (ideally >=4)
    # steps whenever the resulting blocks can stay sublane-aligned.
    if n_rows >= 2 * sublane:
        tb = min(tb, pl.cdiv(n_rows, 2))
    if n_rows >= 4 * sublane:
        tb = min(tb, pl.cdiv(n_rows, 4))

    if tb >= n_rows:
        return int(n_rows)                 # full extent: always a legal block

    # Partial blocks: keep the sublane (second-to-last) dim 8-aligned, and
    # prefer the dtype's packing (16 bf16 / 32 int8) when there is room.
    align = sublane if tb >= sublane else 8
    tb = max(8, (tb // align) * align)
    # NOTE: planes larger than a few MiB each would additionally want spatial
    # blocking; SSL-augmentation images are KB-scale so plane-granular is fine.
    return int(min(tb, n_rows))


def _acc_info(dtype):
    """(accumulation dtype, exact-integer path?) for an input dtype."""
    d = jnp.dtype(dtype)
    if jnp.issubdtype(d, jnp.integer) and d.itemsize <= 2:
        return jnp.int32, True             # 16 * |x| fits easily in int32
    return jnp.float32, False


def _make_blur_kernel(w, s, row_len, out_dtype):
    """Separable [1,2,1]x[1,2,1]/16 blur on lane-dense flattened blocks.

    Each block row holds `row_len // s` complete (h, w) planes flattened
    row-major; rolls run along the flat lane axis and the resident
    (4, row_len) boundary masks zero contributions that would cross a
    row edge or a plane boundary.
    """
    acc_dtype, integer_path = _acc_info(out_dtype)
    sh_r = (row_len - 1) % row_len         # static shifts (pre-reduced)
    sh_u = w % row_len
    sh_d = (row_len - w) % row_len

    def kernel(m_ref, x_ref, o_ref):
        x = x_ref[...].astype(acc_dtype)
        zero = jnp.zeros((), acc_dtype)

        # Host-precomputed masks: (1, row_len) rows, broadcast over tb rows.
        has_l = m_ref[0:1, :] != 0         # has a left neighbour in-plane
        has_r = m_ref[1:2, :] != 0         # has a right neighbour in-plane
        has_u = m_ref[2:3, :] != 0         # has a row above in-plane
        has_d = m_ref[3:4, :] != 0         # has a row below in-plane

        # Horizontal [1, 2, 1] pass (in-plane neighbours are +-1 flat index).
        left = jnp.where(has_l, pltpu.roll(x, shift=1, axis=1), zero)
        right = jnp.where(has_r, pltpu.roll(x, shift=sh_r, axis=1), zero)
        t = x + x + left + right

        # Vertical [1, 2, 1] pass (in-plane rows are `w` apart).
        up = jnp.where(has_u, pltpu.roll(t, shift=sh_u, axis=1), zero)
        down = jnp.where(has_d, pltpu.roll(t, shift=sh_d, axis=1), zero)
        acc = t + t + up + down            # 16x the blurred value

        if integer_path:
            # Exact for <=16-bit integer inputs; round half-up, then /16.
            y = jnp.right_shift(acc + 8, 4)
        else:
            y = acc * (1.0 / 16.0)
            if jnp.issubdtype(jnp.dtype(out_dtype), jnp.integer):
                y = jnp.round(y)           # wide-int inputs: round, not trunc
        o_ref[...] = y.astype(o_ref.dtype)

    return kernel


def _gaussian_blur3x3(x):
    """fn(x): 3x3 Gaussian blur, zero padding, NCHW, via the Pallas kernel."""
    n, c, h, w = x.shape
    nc, s = n * c, h * w
    k = _fold_factor(nc, s)                # planes folded per block row
    n_rows, row_len = nc // k, k * s
    xf = x.reshape(n_rows, row_len)        # free row-major reshape

    acc_dtype, _ = _acc_info(x.dtype)
    in_itemsize = jnp.dtype(x.dtype).itemsize
    acc_itemsize = jnp.dtype(acc_dtype).itemsize
    sublane = max(8, 32 // in_itemsize)    # 8 f32 / 16 bf16 / 32 int8

    vmem_limit = _vmem_limit_bytes()
    tb = _plan_tb(n_rows, row_len, in_itemsize, acc_itemsize, sublane, vmem_limit)
    grid = (pl.cdiv(n_rows, tb),)

    # Boundary masks, precomputed once on host (tiny), resident in VMEM.
    j = np.arange(row_len, dtype=np.int32)
    col = j % w
    jp = j % s
    masks = jnp.asarray(
        np.stack([col > 0, col < w - 1, jp >= w, jp < s - w]).astype(np.int32))

    out = pl.pallas_call(
        _make_blur_kernel(w, s, row_len, x.dtype),
        out_shape=jax.ShapeDtypeStruct((n_rows, row_len), x.dtype),
        grid=grid,
        in_specs=[
            pl.BlockSpec((4, row_len), lambda i: (0, 0)),      # resident masks
            pl.BlockSpec((tb, row_len), lambda i: (i, 0)),
        ],
        out_specs=pl.BlockSpec((tb, row_len), lambda i: (i, 0)),
        compiler_params=pltpu.CompilerParams(
            dimension_semantics=("parallel",),
            vmem_limit_bytes=vmem_limit),
    )(masks, xf)
    return out.reshape(n, c, h, w)


def random_apply(x, p, *, seed=0):
    """Pallas implementation of RandomApply(fn=gaussian_blur3x3, p=p)."""
    rng = random.Random(seed)
    if rng.random() > p:
        # Identity branch: host-side early-out -> zero HBM traffic, no kernel.
        return x
    return _gaussian_blur3x3(x)


def _blur_ref(x):
    """Pure-JAX reference for fn (3x3 Gaussian blur, zero padding)."""
    N, C, H, W = x.shape
    acc_dtype, integer_path = _acc_info(x.dtype)
    xp = jnp.pad(x.astype(acc_dtype), ((0, 0), (0, 0), (1, 1), (1, 1)))
    wts = [[1, 2, 1], [2, 4, 2], [1, 2, 1]]
    out = jnp.zeros(x.shape, acc_dtype)
    for di in range(3):
        for dj in range(3):
            out = out + wts[di][dj] * xp[:, :, di:di + H, dj:dj + W]
    if integer_path:
        return ((out + 8) >> 4).astype(x.dtype)
    return (out * (1.0 / 16.0)).astype(x.dtype)


if __name__ == "__main__":
    key = jax.random.PRNGKey(0)
    k1, k2, k3, k4 = jax.random.split(key, 4)

    # 1) Applied branch: random.Random(0).random() ~= 0.844 <= p=0.9 -> fn(x).
    x = jax.random.uniform(k1, (2, 4, 16, 16), dtype=jnp.float32)
    y = jax.block_until_ready(random_apply(x, 0.9, seed=0))
    rng = random.Random(0)
    ref = _blur_ref(x) if rng.random() <= 0.9 else x
    assert y.shape == x.shape and y.dtype == x.dtype
    assert jnp.allclose(y, ref, atol=1e-5, rtol=1e-5)

    # 2) Identity branch (p = 0 -> coin flip > p): host-side early-out.
    y_id = jax.block_until_ready(random_apply(x, 0.0, seed=0))
    assert jnp.allclose(y_id, x)

    # 3) Tiny 8x8 planes: plane folding keeps stores lane-dense (128 lanes).
    x_small = jax.random.uniform(k2, (2, 4, 8, 8), dtype=jnp.float32)
    y_small = jax.block_until_ready(random_apply(x_small, 1.0, seed=0))
    assert jnp.allclose(y_small, _blur_ref(x_small), atol=1e-5, rtol=1e-5)

    # 4) Larger batch: exercises the multi-step grid / megacore split path.
    x_big = jax.random.uniform(k3, (4, 8, 32, 32), dtype=jnp.float32)
    y_big = jax.block_until_ready(random_apply(x_big, 1.0, seed=0))
    assert jnp.allclose(y_big, _blur_ref(x_big), atol=1e-5, rtol=1e-5)

    # 5) uint8 images: exact integer accumulation + round-half-up.
    x_u8 = jax.random.randint(k4, (2, 8, 16, 16), 0, 256,
                              dtype=jnp.int32).astype(jnp.uint8)
    y_u8 = jax.block_until_ready(random_apply(x_u8, 1.0, seed=0))
    assert y_u8.dtype == jnp.uint8
    assert jnp.array_equal(y_u8, _blur_ref(x_u8))

    print("KERNEL_OK")
</pallas_src>

<mosaic_0001>
module attributes {stable_mosaic.version = 11 : i64} {
  func.func @kernel(%arg0: i32, %arg1: memref<4x256xi32, #tpu.memory_space<vmem>>, %arg2: memref<8x256xf32, #tpu.memory_space<vmem>>, %arg3: memref<8x256xf32, #tpu.memory_space<vmem>>) attributes {dimension_semantics = [#tpu.dimension_semantics<parallel>], iteration_bounds = array<i64: 1>, scalar_prefetch = 0 : i64, scratch_operands = 0 : i64, tpu.core_type = #tpu.core_type<tc>, window_params = [{pipeline_mode = #tpu.pipeline_mode<synchronous>, transform_indices = @transform_0, window_bounds = array<i64: 4, 256>}, {transform_indices = @transform_1, window_bounds = array<i64: 8, 256>}, {transform_indices = @transform_2, window_bounds = array<i64: 8, 256>}]} {
    %c0 = arith.constant 0 : index
    %c0_0 = arith.constant 0 : index
    %0 = vector.load %arg2[%c0, %c0_0] : memref<8x256xf32, #tpu.memory_space<vmem>>, vector<8x256xf32>
    %c0_1 = arith.constant 0 : index
    %c0_2 = arith.constant 0 : index
    %1 = vector.load %arg1[%c0_1, %c0_2] : memref<4x256xi32, #tpu.memory_space<vmem>>, vector<1x256xi32>
    %c0_i32 = arith.constant 0 : i32
    %2 = vector.broadcast %c0_i32 : i32 to vector<1x256xi32>
    %3 = arith.cmpi ne, %1, %2 : vector<1x256xi32>
    %c1 = arith.constant 1 : index
    %c0_3 = arith.constant 0 : index
    %4 = vector.load %arg1[%c1, %c0_3] : memref<4x256xi32, #tpu.memory_space<vmem>>, vector<1x256xi32>
    %c0_i32_4 = arith.constant 0 : i32
    %5 = vector.broadcast %c0_i32_4 : i32 to vector<1x256xi32>
    %6 = arith.cmpi ne, %4, %5 : vector<1x256xi32>
    %c2 = arith.constant 2 : index
    %c0_5 = arith.constant 0 : index
    %7 = vector.load %arg1[%c2, %c0_5] : memref<4x256xi32, #tpu.memory_space<vmem>>, vector<1x256xi32>
    %c0_i32_6 = arith.constant 0 : i32
    %8 = vector.broadcast %c0_i32_6 : i32 to vector<1x256xi32>
    %9 = arith.cmpi ne, %7, %8 : vector<1x256xi32>
    %c3 = arith.constant 3 : index
    %c0_7 = arith.constant 0 : index
    %10 = vector.load %arg1[%c3, %c0_7] : memref<4x256xi32, #tpu.memory_space<vmem>>, vector<1x256xi32>
    %c0_i32_8 = arith.constant 0 : i32
    %11 = vector.broadcast %c0_i32_8 : i32 to vector<1x256xi32>
    %12 = arith.cmpi ne, %10, %11 : vector<1x256xi32>
    %c1_i32 = arith.constant 1 : i32
    %13 = tpu.dynamic_rotate %0 by %c1_i32 dim 1 : vector<8x256xf32>, i32 -> vector<8x256xf32>
    %cst = arith.constant 0.000000e+00 : f32
    %14 = vector.shape_cast %3 : vector<1x256xi1> to vector<1x256xi1>
    %15 = vector.broadcast %14 : vector<1x256xi1> to vector<8x256xi1>
    %16 = vector.broadcast %cst : f32 to vector<8x256xf32>
    %17 = arith.select %15, %13, %16 : vector<8x256xi1>, vector<8x256xf32>
    %c255_i32 = arith.constant 255 : i32
    %18 = tpu.dynamic_rotate %0 by %c255_i32 dim 1 : vector<8x256xf32>, i32 -> vector<8x256xf32>
    %cst_9 = arith.constant 0.000000e+00 : f32
    %19 = vector.shape_cast %6 : vector<1x256xi1> to vector<1x256xi1>
    %20 = vector.broadcast %19 : vector<1x256xi1> to vector<8x256xi1>
    %21 = vector.broadcast %cst_9 : f32 to vector<8x256xf32>
    %22 = arith.select %20, %18, %21 : vector<8x256xi1>, vector<8x256xf32>
    %23 = arith.addf %0, %0 : vector<8x256xf32>
    %24 = arith.addf %23, %17 : vector<8x256xf32>
    %25 = arith.addf %24, %22 : vector<8x256xf32>
    %c16_i32 = arith.constant 16 : i32
    %26 = tpu.dynamic_rotate %25 by %c16_i32 dim 1 : vector<8x256xf32>, i32 -> vector<8x256xf32>
    %cst_10 = arith.constant 0.000000e+00 : f32
    %27 = vector.shape_cast %9 : vector<1x256xi1> to vector<1x256xi1>
    %28 = vector.broadcast %27 : vector<1x256xi1> to vector<8x256xi1>
    %29 = vector.broadcast %cst_10 : f32 to vector<8x256xf32>
    %30 = arith.select %28, %26, %29 : vector<8x256xi1>, vector<8x256xf32>
    %c240_i32 = arith.constant 240 : i32
    %31 = tpu.dynamic_rotate %25 by %c240_i32 dim 1 : vector<8x256xf32>, i32 -> vector<8x256xf32>
    %cst_11 = arith.constant 0.000000e+00 : f32
    %32 = vector.shape_cast %12 : vector<1x256xi1> to vector<1x256xi1>
    %33 = vector.broadcast %32 : vector<1x256xi1> to vector<8x256xi1>
    %34 = vector.broadcast %cst_11 : f32 to vector<8x256xf32>
    %35 = arith.select %33, %31, %34 : vector<8x256xi1>, vector<8x256xf32>
    %36 = arith.addf %25, %25 : vector<8x256xf32>
    %37 = arith.addf %36, %30 : vector<8x256xf32>
    %38 = arith.addf %37, %35 : vector<8x256xf32>
    %cst_12 = arith.constant 6.250000e-02 : f32
    %39 = vector.broadcast %cst_12 : f32 to vector<8x256xf32>
    %40 = arith.mulf %38, %39 : vector<8x256xf32>
    %c0_13 = arith.constant 0 : index
    %c0_14 = arith.constant 0 : index
    %41 = vector.load %arg3[%c0_13, %c0_14] : memref<8x256xf32, #tpu.memory_space<vmem>>, vector<8x256xf32>
    tpu.vector_store %arg3[%c0_13, %c0_14], %40 {strides = array<i32>} : memref<8x256xf32, #tpu.memory_space<vmem>>, vector<8x256xf32>,
    return
  }
  func.func @transform_0(%arg0: i32) -> (i32, i32) {
    %c0_i32 = arith.constant 0 : i32
    %c0_i32_0 = arith.constant 0 : i32
    %c0_i32_1 = arith.constant 0 : i32
    return %c0_i32, %c0_i32_0 : i32, i32
  }
  func.func @transform_1(%arg0: i32) -> (i32, i32) {
    %c0_i32 = arith.constant 0 : i32
    %c0_i32_0 = arith.constant 0 : i32
    return %arg0, %c0_i32 : i32, i32
  }
  func.func @transform_2(%arg0: i32) -> (i32, i32) {
    %c0_i32 = arith.constant 0 : i32
    %c0_i32_0 = arith.constant 0 : i32
    return %arg0, %c0_i32 : i32, i32
  }
}

</mosaic_0001>

<llo_original>
// kernel: tpu_custom_call.1
$region0: #{tpu_custom_call.1}
  #allocation0 [shape = 'u32[]', space=smem, size = 0x4, offset = 0x4, fixed_abs, tag = 'smem constant byte address 0x4 - core index']
  #allocation1 [shape = 'u32[72,128]{1,0:T(1,128)}', space=vmem, size = 0x9000, scoped, tag = 'internal scratch']
  %s0 = inlined_call_operand.hbm [shape: s32[4,256], index: 0, kind: input, shape index: {}]
  %s1 = inlined_call_operand.hbm [shape: f32[8,256], index: 1, kind: input, shape index: {}]
  %s2 = inlined_call_operand.hbm [shape: f32[8,256], index: 2, kind: output, shape index: {}]
  %s3 = sld [smem:[#allocation0]]
  $region26: #{tpu_custom_call.1} parent=0
    _
  %s5 = ssub.s32 1, %s3
  %s6 = scalar_select 0, %s5, %s3
  $region1: #{tpu_custom_call.1} parent=0
    #allocation2 [shape = 'u8[4096]{0}', space=vmem, size = 0x1000, scoped, tag = 'input window, operand 0, single buffered']
    #allocation3 [shape = 's32[1]{0}', space=sflag, size = 0x4, scoped, tag = 'scoped memory for tpu_custom_call.1']
    #allocation4 [shape = 's32[1]{0}', space=sflag, size = 0x4, scoped, tag = 'scoped memory for tpu_custom_call.1']
    #allocation5 [shape = 'u8[8192]{0}', space=vmem, size = 0x2000, scoped, tag = 'input window, operand 1, single buffered']
    #allocation6 [shape = 's32[1]{0}', space=sflag, size = 0x4, scoped, tag = 'scoped memory for tpu_custom_call.1']
    #allocation7 [shape = 'u8[8192]{0}', space=vmem, size = 0x2000, scoped, tag = 'output window, operand 0, single buffered']
    %7 = vsyncpa [#allocation3], 0
    %8 = vsyncpa [#allocation6], 0
    %9 = vsyncpa [#allocation4], 0
    // Predicated region
    $region2: #{tpu_custom_call.1} parent=1 // pred_check
      _
    $region3: #{tpu_custom_call.1} parent=1 // pred_check_branch
      %11 = sbr.rel (0) target = $region5
    $region4: #{tpu_custom_call.1} parent=1 // pred_region
      %13 = vsyncadd [#allocation3], 0
      %s15 = sshll.u32 %s0, 4
      %s16 = int_to_ptr.hbm [resolvable:$true] %s15
      %s17 = sshll.u32 [#allocation2], 4
      %s18 = int_to_ptr.vmem [resolvable:$true] %s17
      %20 = dma.hbm_to_vmem [thread:$0]  %s16, 128, %s18, [#allocation3]
    $region5: #{tpu_custom_call.1} parent=1 // pred_fallthru
      _
    // Predicated region
    $region6: #{tpu_custom_call.1} parent=1 // pred_check
      _
    $region7: #{tpu_custom_call.1} parent=1 // pred_check_branch
      %22 = sbr.rel (0) target = $region9
    $region8: #{tpu_custom_call.1} parent=1 // pred_region
      %24 = vsyncadd [#allocation6], 0
      %s26 = sshll.u32 %s1, 4
      %s27 = int_to_ptr.hbm [resolvable:$true] %s26
      %s28 = sshll.u32 [#allocation5], 4
      %s29 = int_to_ptr.vmem [resolvable:$true] %s28
      %31 = dma.hbm_to_vmem [thread:$0]  %s27, 256, %s29, [#allocation6]
    $region9: #{tpu_custom_call.1} parent=1 // pred_fallthru
      _
    // Predicated region
    $region10: #{tpu_custom_call.1} parent=1 // pred_check
      _
    $region11: #{tpu_custom_call.1} parent=1 // pred_check_branch
      %33 = sbr.rel (0) target = $region13
    $region12: #{tpu_custom_call.1} parent=1 // pred_region
      %35 = dma.done [#allocation3], 128
    $region13: #{tpu_custom_call.1} parent=1 // pred_fallthru
      _
    // Predicated region
    $region14: #{tpu_custom_call.1} parent=1 // pred_check
      _
    $region15: #{tpu_custom_call.1} parent=1 // pred_check_branch
      %37 = sbr.rel (0) target = $region17
    $region16: #{tpu_custom_call.1} parent=1 // pred_region
      %39 = dma.done [#allocation6], 256
    $region17: #{tpu_custom_call.1} parent=1 // pred_fallthru
      _
    %v40 = vld [vmem:[#allocation5] sm:$0xff]
    %v41 = vld [vmem:[#allocation5 + $0x8] sm:$0xff]
    %v42 = vld [vmem:[#allocation2] ss:$4 sm:$0x3]
    %vm43 = vcmp.ne.s32.totalorder %v42, 0
    %s44 = scalar_lea.vmem [#allocation2], 1
    %v45 = vld [vmem:[%s44] ss:$4 sm:$0x3]
    %vm46 = vcmp.ne.s32.totalorder %v45, 0
    %s47 = scalar_lea.vmem [#allocation2], 2
    %v48 = vld [vmem:[%s47] ss:$4 sm:$0x3]
    %vm49 = vcmp.ne.s32.totalorder %v48, 0
    %s50 = scalar_lea.vmem [#allocation2], 3
    %v51 = vld [vmem:[%s50] ss:$4 sm:$0x3]
    %vm52 = vcmp.ne.s32.totalorder %v51, 0
    %53 = vrot.lane.b32.xlu0 %v40, 1
    %v54 = vpop.permute.xlu0 %53
    %55 = vrot.lane.b32.xlu0 %v41, 1
    %v56 = vpop.permute.xlu0 %55
    %v57 = vlaneseq
    %v58 = vand.u32 %v57, 127
    %vm59 = vcmp.lt.s32.totalorder %v58, 1
    %v60 = vsel %vm59, %v54, %v56
    %v61 = vsel %vm59, %v56, %v54
    %v62 = vsel %vm43, 1, 0
    %v63 = vperm.slane %v62, 0
    %v64 = vperm.slane %v62, 1
    %vm65 = vcmp.eq.s32.totalorder %v63, 1
    %vm66 = vcmp.eq.s32.totalorder %v64, 1
    %v67 = vsel %vm65, %v61, 0.0
    %v68 = vsel %vm66, %v60, 0.0
    %69 = vrot.lane.b32.xlu0 %v40, 127
    %v70 = vpop.permute.xlu0 %69
    %71 = vrot.lane.b32.xlu0 %v41, 127
    %v72 = vpop.permute.xlu0 %71
    %vm73 = vcmp.lt.s32.totalorder %v58, 127
    %v74 = vsel %vm73, %v70, %v72
    %v75 = vsel %vm73, %v72, %v70
    %v76 = vsel %vm46, 1, 0
    %v77 = vperm.slane %v76, 0
    %v78 = vperm.slane %v76, 1
    %vm79 = vcmp.eq.s32.totalorder %v77, 1
    %vm80 = vcmp.eq.s32.totalorder %v78, 1
    %v81 = vsel %vm79, %v74, 0.0
    %v82 = vsel %vm80, %v75, 0.0
    %v83 = vadd.f32 %v40, %v40
    %v84 = vadd.f32 %v41, %v41
    %v85 = vadd.f32 %v83, %v67
    %v86 = vadd.f32 %v84, %v68
    %v87 = vadd.f32 %v85, %v81
    %v88 = vadd.f32 %v86, %v82
    %89 = vrot.lane.b32.xlu0 %v87, 16
    %v90 = vpop.permute.xlu0 %89
    %91 = vrot.lane.b32.xlu0 %v88, 16
    %v92 = vpop.permute.xlu0 %91
    %vm93 = vcmp.lt.s32.totalorder %v58, 16
    %v94 = vsel %vm93, %v90, %v92
    %v95 = vsel %vm93, %v92, %v90
    %v96 = vsel %vm49, 1, 0
    %v97 = vperm.slane %v96, 0
    %v98 = vperm.slane %v96, 1
    %vm99 = vcmp.eq.s32.totalorder %v97, 1
    %vm100 = vcmp.eq.s32.totalorder %v98, 1
    %v101 = vsel %vm99, %v95, 0.0
    %v102 = vsel %vm100, %v94, 0.0
    %103 = vrot.lane.b32.xlu0 %v87, 112
    %v104 = vpop.permute.xlu0 %103
    %105 = vrot.lane.b32.xlu0 %v88, 112
    %v106 = vpop.permute.xlu0 %105
    %vm107 = vcmp.lt.s32.totalorder %v58, 112
    %v108 = vsel %vm107, %v104, %v106
    %v109 = vsel %vm107, %v106, %v104
    %v110 = vsel %vm52, 1, 0
    %v111 = vperm.slane %v110, 0
    %v112 = vperm.slane %v110, 1
    %vm113 = vcmp.eq.s32.totalorder %v111, 1
    %vm114 = vcmp.eq.s32.totalorder %v112, 1
    %v115 = vsel %vm113, %v108, 0.0
    %v116 = vsel %vm114, %v109, 0.0
    %v117 = vadd.f32 %v87, %v87
    %v118 = vadd.f32 %v88, %v88
    %v119 = vadd.f32 %v117, %v101
    %v120 = vadd.f32 %v118, %v102
    %v121 = vadd.f32 %v119, %v115
    %v122 = vadd.f32 %v120, %v116
    %v123 = vmul.f32 %v121, 0.0625
    %v124 = vmul.f32 %v122, 0.0625
    %125 = vst [vmem:[#allocation7] sm:$0xff] %v123
    %126 = vst [vmem:[#allocation7 + $0x8] sm:$0xff] %v124
    // Predicated region
    $region18: #{tpu_custom_call.1} parent=1 // pred_check
      _
    $region19: #{tpu_custom_call.1} parent=1 // pred_check_branch
      %128 = sbr.rel (0) target = $region21
    $region20: #{tpu_custom_call.1} parent=1 // pred_region
      %130 = vsyncadd [#allocation4], 0
      %s132 = sshll.u32 [#allocation7], 4
      %s133 = int_to_ptr.vmem [resolvable:$true] %s132
      %s134 = sshll.u32 %s2, 4
      %s135 = int_to_ptr.hbm [resolvable:$true] %s134
      %137 = dma.vmem_to_hbm [thread:$0]  %s133, 256, %s135, [#allocation4]
    $region21: #{tpu_custom_call.1} parent=1 // pred_fallthru
      _
    // Predicated region
    $region22: #{tpu_custom_call.1} parent=1 // pred_check
      _
    $region23: #{tpu_custom_call.1} parent=1 // pred_check_branch
      %139 = sbr.rel (0) target = $region25
    $region24: #{tpu_custom_call.1} parent=1 // pred_region
      %141 = dma.done [#allocation4], 256
    $region25: #{tpu_custom_call.1} parent=1 // pred_fallthru
      _
    %142 = vsyncpa [#allocation3], 1
    %143 = vsyncpa [#allocation6], 1
    %144 = vsyncpa [#allocation4], 1

</llo_original>
